<compile_context>
chip_gen: v7x
topology: tpu7x:2x2x1
jax: 0.10.0
libtpu: 0.0.40
codegen_flags: <defaults>
</compile_context>

<pallas_src>
import functools
import math

import jax
import jax.numpy as jnp
from jax.experimental import pallas as pl
from jax.experimental.pallas import tpu as pltpu

LANES = 128


def _round_up(x, m):
    return (x + m - 1) // m * m


def _plan_grid(groups, tile_groups):
    """Pick (tm, steps, groups_pad) over 'packed group' rows.

    tm is a multiple of 8 (sublane alignment); padding is at most ~8*steps
    rows; the step count is >= 2 and even whenever there is enough work so
    both v7x TensorCores get balanced shares.
    """
    groups = max(groups, 1)
    min_pad = _round_up(groups, 8)
    max_steps = min_pad // 8                      # each step needs >= 8 rows
    steps = max(1, -(-groups // tile_groups))
    if max_steps >= 2:
        steps = max(steps, 2)                     # feed both v7x cores
        if steps % 2:
            steps += 1                            # balanced split
    steps = min(steps, max_steps)
    tm = _round_up(-(-groups // steps), 8)
    groups_pad = steps * tm
    return tm, steps, groups_pad


def _time2vec_kernel(tau_ref, wexp_ref, b_ref, mask_ref, out_ref, *, activation):
    """One grid step.

    tau_ref : (tm, PACK)         packed taus: row g, slot k  <->  tau[PACK*g + k]
    wexp_ref: (PACK, PACK*D)     block-diagonal expansion with w folded in (resident)
    b_ref   : (1, PACK*D)        bias tiled PACK times (resident)
    mask_ref: (1, PACK*D) int32  1 on the linear (trend) lanes (resident)
    out_ref : (tm, PACK*D)       lane-dense packed output
    """
    tau = tau_ref[...].astype(jnp.float32)

    if tau_ref.shape[-1] == 1:
        # Degenerate K=1 contraction: keep it off the MXU (VPU broadcast FMA).
        lin = tau * wexp_ref[...] + b_ref[...]
    else:
        # Tiny block-diagonal matmul on the otherwise-idle MXU performs the
        # PACK -> PACK*D lane expansion and the w multiply in one op.
        lin = jnp.dot(tau, wexp_ref[...],
                      preferred_element_type=jnp.float32,
                      precision=jax.lax.Precision.HIGHEST) + b_ref[...]

    f = jnp.sin if activation == "sin" else jnp.cos
    periodic = f(lin)
    out_ref[...] = jnp.where(mask_ref[...] != 0, lin, periodic).astype(out_ref.dtype)


def time2vec_pallas(tau, w, b, w0, b0, *, activation="sin", tile_groups=4096,
                    out_dtype=None):
    """Time2Vec forward: concat([f(tau @ w + b), tau @ w0 + b0], -1).

    tau: (..., 1); w, b: (1, out_dim - 1); w0, b0: (1, 1). Returns (..., out_dim).
    """
    assert tau.shape[-1] == 1, "Time2Vec expects in_features == 1"
    lead = tau.shape[:-1]
    n = math.prod(lead) if lead else 1
    d = w.shape[1] + 1
    if out_dtype is None:
        out_dtype = jnp.result_type(tau.dtype, w.dtype)

    # Fuse the concat away: single (1, D) parameter rows (w || w0, b || b0).
    w_full = jnp.concatenate([w, w0], axis=1).astype(jnp.float32)
    b_full = jnp.concatenate([b, b0], axis=1).astype(jnp.float32)

    # Pack `pack` logical rows per 128-lane output row -> full-width stores.
    pack = LANES // d if (d <= LANES and LANES % d == 0) else 1
    width = pack * d

    # Resident params: block-diagonal expansion with w folded in, tiled bias,
    # and the hoisted linear-lane select mask.
    wexp = jnp.kron(jnp.eye(pack, dtype=jnp.float32), w_full)        # (pack, width)
    b_tiled = jnp.tile(b_full, (1, pack))                            # (1, width)
    lane_mask = (jnp.arange(width, dtype=jnp.int32) % d == d - 1
                 ).astype(jnp.int32).reshape(1, width)               # (1, width)

    groups = -(-n // pack)
    tm, steps, groups_pad = _plan_grid(groups, tile_groups)

    tau_flat = tau.reshape(-1)                   # native dtype; cast in-kernel
    total = groups_pad * pack
    if total != n:
        tau_flat = jnp.pad(tau_flat, (0, total - n))
    tau_packed = tau_flat.reshape(groups_pad, pack)

    kernel = functools.partial(_time2vec_kernel, activation=activation)

    # Per-step VMEM (double-buffered), tm=4096: tau ~4 MiB + out ~4 MiB -> well
    # under every generation's default scoped-VMEM limit (incl. v5e's 16 MiB).
    out = pl.pallas_call(
        kernel,
        out_shape=jax.ShapeDtypeStruct((groups_pad, width), out_dtype),
        grid=(steps,),
        in_specs=[
            pl.BlockSpec((tm, pack), lambda i: (i, 0)),      # packed tau tile
            pl.BlockSpec((pack, width), lambda i: (0, 0)),   # w expansion (resident)
            pl.BlockSpec((1, width), lambda i: (0, 0)),      # bias (resident)
            pl.BlockSpec((1, width), lambda i: (0, 0)),      # lane mask (resident)
        ],
        out_specs=pl.BlockSpec((tm, width), lambda i: (i, 0)),
        compiler_params=pltpu.CompilerParams(
            dimension_semantics=("parallel",)),
    )(tau_packed, wexp, b_tiled, lane_mask)

    # Row-major unpack: (groups_pad, pack*d) -> (groups_pad*pack, d).  This is a
    # contiguity-preserving reshape (no transpose / gather).
    out = out.reshape(groups_pad * pack, d)[:n]
    return out.reshape(*lead, d)


def time2vec_reference(tau, w, b, w0, b0, *, activation="sin"):
    f = jnp.sin if activation == "sin" else jnp.cos
    hi = jax.lax.Precision.HIGHEST
    v1 = f(jnp.matmul(tau, w, precision=hi) + b)
    v2 = jnp.matmul(tau, w0, precision=hi) + b0
    return jnp.concatenate([v1, v2], axis=-1)


if __name__ == "__main__":
    key = jax.random.PRNGKey(0)
    k_tau, k_w, k_b, k_w0, k_b0, k_tau2 = jax.random.split(key, 6)

    batch, seq = 2, 8
    out_dim = 32            # Time2Vec out_dim; in_features = 1
    in_features = 1

    # Deterministic "torch.randn"-style parameter init.
    w0 = jax.random.normal(k_w0, (in_features, 1), dtype=jnp.float32)
    b0 = jax.random.normal(k_b0, (in_features, 1), dtype=jnp.float32)
    w = jax.random.normal(k_w, (in_features, out_dim - 1), dtype=jnp.float32)
    b = jax.random.normal(k_b, (in_features, out_dim - 1), dtype=jnp.float32)

    # Input: time scalars, shape (batch, seq, 1).
    tau = jax.random.normal(k_tau, (batch, seq, in_features), dtype=jnp.float32)

    ref = time2vec_reference(tau, w, b, w0, b0, activation="sin")
    out = jax.block_until_ready(time2vec_pallas(tau, w, b, w0, b0, activation="sin"))
    assert out.shape == (batch, seq, out_dim), out.shape
    assert jnp.allclose(out, ref, atol=1e-5, rtol=1e-5), "mismatch vs reference"

    # Multi-step pipelined grid (even step count -> balanced across v7x cores).
    tau2 = jax.random.normal(k_tau2, (4, 300, in_features), dtype=jnp.float32)
    ref2 = time2vec_reference(tau2, w, b, w0, b0, activation="sin")
    out2 = jax.block_until_ready(
        time2vec_pallas(tau2, w, b, w0, b0, activation="sin", tile_groups=64))
    assert out2.shape == (4, 300, out_dim), out2.shape
    assert jnp.allclose(out2, ref2, atol=1e-5, rtol=1e-5), "tiled mismatch"

    print("KERNEL_OK")
</pallas_src>

<mosaic_0001>
module attributes {stable_mosaic.version = 11 : i64} {
  func.func @_time2vec_kernel(%arg0: i32, %arg1: memref<8x4xf32, #tpu.memory_space<vmem>>, %arg2: memref<4x128xf32, #tpu.memory_space<vmem>>, %arg3: memref<1x128xf32, #tpu.memory_space<vmem>>, %arg4: memref<1x128xi32, #tpu.memory_space<vmem>>, %arg5: memref<8x128xf32, #tpu.memory_space<vmem>>) attributes {dimension_semantics = [#tpu.dimension_semantics<parallel>], iteration_bounds = array<i64: 1>, scalar_prefetch = 0 : i64, scratch_operands = 0 : i64, tpu.core_type = #tpu.core_type<tc>, window_params = [{transform_indices = @transform_0, window_bounds = array<i64: 8, 4>}, {pipeline_mode = #tpu.pipeline_mode<synchronous>, transform_indices = @transform_1, window_bounds = array<i64: 4, 128>}, {pipeline_mode = #tpu.pipeline_mode<synchronous>, transform_indices = @transform_2, window_bounds = array<i64: 1, 128>}, {pipeline_mode = #tpu.pipeline_mode<synchronous>, transform_indices = @transform_3, window_bounds = array<i64: 1, 128>}, {transform_indices = @transform_4, window_bounds = array<i64: 8, 128>}]} {
    %c0 = arith.constant 0 : index
    %c0_0 = arith.constant 0 : index
    %0 = vector.load %arg1[%c0, %c0_0] : memref<8x4xf32, #tpu.memory_space<vmem>>, vector<8x4xf32>
    %c0_1 = arith.constant 0 : index
    %c0_2 = arith.constant 0 : index
    %1 = vector.load %arg2[%c0_1, %c0_2] : memref<4x128xf32, #tpu.memory_space<vmem>>, vector<4x128xf32>
    %cst = arith.constant dense<0.000000e+00> : vector<8x128xf32>
    %2 = tpu.matmul %0, %1, %cst {dimension_numbers = #tpu.dot_dimension_numbers<[1], [0], [0], [1], [0, 0, 1, 1], [], []>, precision = #tpu.contract_precision<fp32>} : vector<8x4xf32>, vector<4x128xf32>, vector<8x128xf32> -> vector<8x128xf32>
    %c0_3 = arith.constant 0 : index
    %c0_4 = arith.constant 0 : index
    %3 = vector.load %arg3[%c0_3, %c0_4] : memref<1x128xf32, #tpu.memory_space<vmem>>, vector<1x128xf32>
    %4 = vector.broadcast %3 : vector<1x128xf32> to vector<8x128xf32>
    %5 = arith.addf %2, %4 : vector<8x128xf32>
    %6 = math.sin %5 : vector<8x128xf32>
    %c0_5 = arith.constant 0 : index
    %c0_6 = arith.constant 0 : index
    %7 = vector.load %arg4[%c0_5, %c0_6] : memref<1x128xi32, #tpu.memory_space<vmem>>, vector<1x128xi32>
    %c0_i32 = arith.constant 0 : i32
    %8 = vector.broadcast %c0_i32 : i32 to vector<1x128xi32>
    %9 = arith.cmpi ne, %7, %8 : vector<1x128xi32>
    %10 = vector.shape_cast %9 : vector<1x128xi1> to vector<1x128xi1>
    %11 = vector.broadcast %10 : vector<1x128xi1> to vector<8x128xi1>
    %12 = arith.select %11, %5, %6 : vector<8x128xi1>, vector<8x128xf32>
    %c0_7 = arith.constant 0 : index
    %c0_8 = arith.constant 0 : index
    %13 = vector.load %arg5[%c0_7, %c0_8] : memref<8x128xf32, #tpu.memory_space<vmem>>, vector<8x128xf32>
    tpu.vector_store %arg5[%c0_7, %c0_8], %12 {strides = array<i32>} : memref<8x128xf32, #tpu.memory_space<vmem>>, vector<8x128xf32>,
    return
  }
  func.func @transform_0(%arg0: i32) -> (i32, i32) {
    %c0_i32 = arith.constant 0 : i32
    %c0_i32_0 = arith.constant 0 : i32
    return %arg0, %c0_i32 : i32, i32
  }
  func.func @transform_1(%arg0: i32) -> (i32, i32) {
    %c0_i32 = arith.constant 0 : i32
    %c0_i32_0 = arith.constant 0 : i32
    %c0_i32_1 = arith.constant 0 : i32
    return %c0_i32, %c0_i32_0 : i32, i32
  }
  func.func @transform_2(%arg0: i32) -> (i32, i32) {
    %c0_i32 = arith.constant 0 : i32
    %c0_i32_0 = arith.constant 0 : i32
    %c0_i32_1 = arith.constant 0 : i32
    return %c0_i32, %c0_i32_0 : i32, i32
  }
  func.func @transform_3(%arg0: i32) -> (i32, i32) {
    %c0_i32 = arith.constant 0 : i32
    %c0_i32_0 = arith.constant 0 : i32
    %c0_i32_1 = arith.constant 0 : i32
    return %c0_i32, %c0_i32_0 : i32, i32
  }
  func.func @transform_4(%arg0: i32) -> (i32, i32) {
    %c0_i32 = arith.constant 0 : i32
    %c0_i32_0 = arith.constant 0 : i32
    return %arg0, %c0_i32 : i32, i32
  }
}

</mosaic_0001>

<llo_original>
// kernel: tpu_custom_call.1
$region0: #{tpu_custom_call.1}
  #allocation0 [shape = 'u32[]', space=smem, size = 0x4, offset = 0x4, fixed_abs, tag = 'smem constant byte address 0x4 - core index']
  #allocation1 [shape = 'u32[144,128]{1,0:T(1,128)}', space=vmem, size = 0x12000, scoped, tag = 'internal scratch']
  %s0 = inlined_call_operand.vmem [shape: f32[8,4], index: 0, kind: input, shape index: {}]
  %s1 = inlined_call_operand.vmem [shape: f32[4,128], index: 1, kind: input, shape index: {}]
  %s2 = inlined_call_operand.vmem [shape: f32[1,128], index: 2, kind: input, shape index: {}]
  %s3 = inlined_call_operand.vmem [shape: s32[1,128], index: 3, kind: input, shape index: {}]
  %s4 = inlined_call_operand.hbm [shape: f32[8,128], index: 4, kind: output, shape index: {}]
  %s5 = sld [smem:[#allocation0]]
  $region26: #{tpu_custom_call.1} parent=0
    _
  %s7 = ssub.s32 1, %s5
  %s8 = scalar_select 0, %s7, %s5
  $region1: #{tpu_custom_call.1} parent=0
    #allocation2 [shape = 'u8[4096]{0}', space=vmem, size = 0x1000, scoped, tag = 'output window, operand 0, single buffered']
    #allocation3 [shape = 's32[1]{0}', space=sflag, size = 0x4, scoped, tag = 'scoped memory for tpu_custom_call.1']
    %9 = vsyncpa [#allocation3], 0
    // Predicated region
    $region2: #{tpu_custom_call.1} parent=1 // pred_check
      _
    $region3: #{tpu_custom_call.1} parent=1 // pred_check_branch
      %11 = sbr.rel (0) target = $region5
    $region4: #{tpu_custom_call.1} parent=1 // pred_region
      _
    $region5: #{tpu_custom_call.1} parent=1 // pred_fallthru
      _
    // Predicated region
    $region6: #{tpu_custom_call.1} parent=1 // pred_check
      _
    $region7: #{tpu_custom_call.1} parent=1 // pred_check_branch
      %13 = sbr.rel (0) target = $region9
    $region8: #{tpu_custom_call.1} parent=1 // pred_region
      _
    $region9: #{tpu_custom_call.1} parent=1 // pred_fallthru
      _
    // Predicated region
    $region10: #{tpu_custom_call.1} parent=1 // pred_check
      _
    $region11: #{tpu_custom_call.1} parent=1 // pred_check_branch
      %15 = sbr.rel (0) target = $region13
    $region12: #{tpu_custom_call.1} parent=1 // pred_region
      _
    $region13: #{tpu_custom_call.1} parent=1 // pred_fallthru
      _
    // Predicated region
    $region14: #{tpu_custom_call.1} parent=1 // pred_check
      _
    $region15: #{tpu_custom_call.1} parent=1 // pred_check_branch
      %17 = sbr.rel (0) target = $region17
    $region16: #{tpu_custom_call.1} parent=1 // pred_region
      _
    $region17: #{tpu_custom_call.1} parent=1 // pred_fallthru
      _
    %v18 = vld [vmem:[%s0] sm:$0xff]
    %v19 = vld [vmem:[%s1] sm:$0xf]
    %v20 = vld [vmem:[%s2] sm:$0x1]
    %v22 = vlaneseq
    %v23 = vshrl.u32 %v22, 7
    %v24 = vsub.s32 0, %v23
    %v25 = vrot.slane %v20, %v24
    %vm27 = vcmask 31744
    %v29 = vsel %vm27, %v18, 0
    %vm31 = vcmask 1043456
    %v33 = vsel %vm31, %v19, 0
    %35 = vmatprep.subr.mxu0 0.0
    %v36 = vand.u32 %v33, 4294901760
    %37 = vmatpush1.msra.mxu0 %v36
    %38 = vmatprep.subr.mxu0 0.0
    %39 = vmatpush1.msra.mxu0 0.0
    %40 = vmatprep.subr.mxu0 0.0
    %41 = vmatpush1.msra.mxu0 0.0
    %42 = vmatprep.subr.mxu0 0.0
    %43 = vmatpush1.msra.mxu0 0.0
    %44 = vmatprep.subr.mxu0 0.0
    %45 = vmatpush1.msra.mxu0 0.0
    %46 = vmatprep.subr.mxu0 0.0
    %47 = vmatpush1.msra.mxu0 0.0
    %48 = vmatprep.subr.mxu0 0.0
    %49 = vmatpush1.msra.mxu0 0.0
    %50 = vmatprep.subr.mxu0 0.0
    %51 = vmatpush1.msra.mxu0 0.0
    %52 = vmatprep.subr.mxu0 0.0
    %53 = vmatpush1.msra.mxu0 0.0
    %54 = vmatprep.subr.mxu0 0.0
    %55 = vmatpush1.msra.mxu0 0.0
    %56 = vmatprep.subr.mxu0 0.0
    %57 = vmatpush1.msra.mxu0 0.0
    %58 = vmatprep.subr.mxu0 0.0
    %59 = vmatpush1.msra.mxu0 0.0
    %60 = vmatprep.subr.mxu0 0.0
    %61 = vmatpush1.msra.mxu0 0.0
    %62 = vmatprep.subr.mxu0 0.0
    %63 = vmatpush1.msra.mxu0 0.0
    %64 = vmatprep.subr.mxu0 0.0
    %65 = vmatpush1.msra.mxu0 0.0
    %66 = vmatprep.subr.mxu0 0.0
    %67 = vmatpush1.msra.mxu0 0.0
    %68 = vmatprep.subr.mxu0 0.0
    %69 = vmatpush1.msra.mxu0 0.0
    %70 = vmatprep.subr.mxu0 0.0
    %71 = vmatpush1.msra.mxu0 0.0
    %72 = vmatprep.subr.mxu0 0.0
    %73 = vmatpush1.msra.mxu0 0.0
    %74 = vmatprep.subr.mxu0 0.0
    %75 = vmatpush1.msra.mxu0 0.0
    %76 = vmatprep.subr.mxu0 0.0
    %77 = vmatpush1.msra.mxu0 0.0
    %78 = vmatprep.subr.mxu0 0.0
    %79 = vmatpush1.msra.mxu0 0.0
    %80 = vmatprep.subr.mxu0 0.0
    %81 = vmatpush1.msra.mxu0 0.0
    %82 = vmatprep.subr.mxu0 0.0
    %83 = vmatpush1.msra.mxu0 0.0
    %84 = vmatprep.subr.mxu0 0.0
    %85 = vmatpush1.msra.mxu0 0.0
    %86 = vmatprep.subr.mxu0 0.0
    %87 = vmatpush1.msra.mxu0 0.0
    %88 = vmatprep.subr.mxu0 0.0
    %89 = vmatpush1.msra.mxu0 0.0
    %90 = vmatprep.subr.mxu0 0.0
    %91 = vmatpush1.msra.mxu0 0.0
    %92 = vmatprep.subr.mxu0 0.0
    %93 = vmatpush1.msra.mxu0 0.0
    %94 = vmatprep.subr.mxu0 0.0
    %95 = vmatpush1.msra.mxu0 0.0
    %96 = vmatprep.subr.mxu0 0.0
    %97 = vmatpush1.msra.mxu0 0.0
    %98 = vmatprep.subr.mxu0 0.0
    %99 = vmatpush1.msra.mxu0 0.0
    %100 = vmatprep.mubr.f32.mxu0 0.0
    %v101 = vand.u32 %v29, 4294901760
    %v102 = vsub.f32 %v29, %v101
    %v103 = vand.u32 %v102, 4294901760
    %v104 = vsub.f32 %v102, %v103
    %v105 = vand.u32 %v104, 4294901760
    %106 = vmatmul.mubr.f32.gmra.mrb[0].mxu0 %v105
    %v107 = vpop.f32.mrb[0].mxu0
    %v108 = vadd.f32 %v25, %v107
    %v109 = vpop.f32.mrb[0].mxu0
    %110 = vdwg.mxu0
    %111 = vmatprep.subr.mxu0 0.0
    %v112 = vand.u32 %v33, 4294901760
    %v113 = vsub.f32 %v33, %v112
    %v114 = vand.u32 %v113, 4294901760
    %v115 = vsub.f32 %v113, %v114
    %v116 = vand.u32 %v115, 4294901760
    %117 = vmatpush1.msra.mxu0 %v116
    %118 = vmatprep.subr.mxu0 0.0
    %119 = vmatpush1.msra.mxu0 0.0
    %120 = vmatprep.subr.mxu0 0.0
    %121 = vmatpush1.msra.mxu0 0.0
    %122 = vmatprep.subr.mxu0 0.0
    %123 = vmatpush1.msra.mxu0 0.0
    %124 = vmatprep.subr.mxu0 0.0
    %125 = vmatpush1.msra.mxu0 0.0
    %126 = vmatprep.subr.mxu0 0.0
    %127 = vmatpush1.msra.mxu0 0.0
    %128 = vmatprep.subr.mxu0 0.0
    %129 = vmatpush1.msra.mxu0 0.0
    %130 = vmatprep.subr.mxu0 0.0
    %131 = vmatpush1.msra.mxu0 0.0
    %132 = vmatprep.subr.mxu0 0.0
    %133 = vmatpush1.msra.mxu0 0.0
    %134 = vmatprep.subr.mxu0 0.0
    %135 = vmatpush1.msra.mxu0 0.0
    %136 = vmatprep.subr.mxu0 0.0
    %137 = vmatpush1.msra.mxu0 0.0
    %138 = vmatprep.subr.mxu0 0.0
    %139 = vmatpush1.msra.mxu0 0.0
    %140 = vmatprep.subr.mxu0 0.0
    %141 = vmatpush1.msra.mxu0 0.0
    %142 = vmatprep.subr.mxu0 0.0
    %143 = vmatpush1.msra.mxu0 0.0
    %144 = vmatprep.subr.mxu0 0.0
    %145 = vmatpush1.msra.mxu0 0.0
    %146 = vmatprep.subr.mxu0 0.0
    %147 = vmatpush1.msra.mxu0 0.0
    %148 = vmatprep.subr.mxu0 0.0
    %149 = vmatpush1.msra.mxu0 0.0
    %150 = vmatprep.subr.mxu0 0.0
    %151 = vmatpush1.msra.mxu0 0.0
    %152 = vmatprep.subr.mxu0 0.0
    %153 = vmatpush1.msra.mxu0 0.0
    %154 = vmatprep.subr.mxu0 0.0
    %155 = vmatpush1.msra.mxu0 0.0
    %156 = vmatprep.subr.mxu0 0.0
    %157 = vmatpush1.msra.mxu0 0.0
    %158 = vmatprep.subr.mxu0 0.0
    %159 = vmatpush1.msra.mxu0 0.0
    %160 = vmatprep.subr.mxu0 0.0
    %161 = vmatpush1.msra.mxu0 0.0
    %162 = vmatprep.subr.mxu0 0.0
    %163 = vmatpush1.msra.mxu0 0.0
    %164 = vmatprep.subr.mxu0 0.0
    %165 = vmatpush1.msra.mxu0 0.0
    %166 = vmatprep.subr.mxu0 0.0
    %167 = vmatpush1.msra.mxu0 0.0
    %168 = vmatprep.subr.mxu0 0.0
    %169 = vmatpush1.msra.mxu0 0.0
    %170 = vmatprep.subr.mxu0 0.0
    %171 = vmatpush1.msra.mxu0 0.0
    %172 = vmatprep.subr.mxu0 0.0
    %173 = vmatpush1.msra.mxu0 0.0
    %174 = vmatprep.subr.mxu0 0.0
    %175 = vmatpush1.msra.mxu0 0.0
    %176 = vmatprep.subr.mxu0 0.0
    %177 = vmatpush1.msra.mxu0 0.0
    %178 = vmatprep.subr.mxu0 0.0
    %179 = vmatpush1.msra.mxu0 0.0
    %180 = vmatprep.mubr.f32.mxu0 0.0
    %v181 = vand.u32 %v29, 4294901760
    %182 = vmatmul.mubr.f32.gmra.mrb[0].mxu0 %v181
    %v183 = vpop.f32.mrb[0].mxu0
    %v184 = vadd.f32 %v108, %v183
    %v185 = vpop.f32.mrb[0].mxu0
    %186 = vdwg.mxu0
    %187 = vmatprep.subr.mxu0 0.0
    %v188 = vand.u32 %v33, 4294901760
    %v189 = vsub.f32 %v33, %v188
    %190 = vmatpush1.msra.mxu0 %v189
    %191 = vmatprep.subr.mxu0 0.0
    %192 = vmatpush1.msra.mxu0 0.0
    %193 = vmatprep.subr.mxu0 0.0
    %194 = vmatpush1.msra.mxu0 0.0
    %195 = vmatprep.subr.mxu0 0.0
    %196 = vmatpush1.msra.mxu0 0.0
    %197 = vmatprep.subr.mxu0 0.0
    %198 = vmatpush1.msra.mxu0 0.0
    %199 = vmatprep.subr.mxu0 0.0
    %200 = vmatpush1.msra.mxu0 0.0
    %201 = vmatprep.subr.mxu0 0.0
    %202 = vmatpush1.msra.mxu0 0.0
    %203 = vmatprep.subr.mxu0 0.0
    %204 = vmatpush1.msra.mxu0 0.0
    %205 = vmatprep.subr.mxu0 0.0
    %206 = vmatpush1.msra.mxu0 0.0
    %207 = vmatprep.subr.mxu0 0.0
    %208 = vmatpush1.msra.mxu0 0.0
    %209 = vmatprep.subr.mxu0 0.0
    %210 = vmatpush1.msra.mxu0 0.0
    %211 = vmatprep.subr.mxu0 0.0
    %212 = vmatpush1.msra.mxu0 0.0
    %213 = vmatprep.subr.mxu0 0.0
    %214 = vmatpush1.msra.mxu0 0.0
    %215 = vmatprep.subr.mxu0 0.0
    %216 = vmatpush1.msra.mxu0 0.0
    %217 = vmatprep.subr.mxu0 0.0
    %218 = vmatpush1.msra.mxu0 0.0
    %219 = vmatprep.subr.mxu0 0.0
    %220 = vmatpush1.msra.mxu0 0.0
    %221 = vmatprep.subr.mxu0 0.0
    %222 = vmatpush1.msra.mxu0 0.0
    %223 = vmatprep.subr.mxu0 0.0
    %224 = vmatpush1.msra.mxu0 0.0
    %225 = vmatprep.subr.mxu0 0.0
    %226 = vmatpush1.msra.mxu0 0.0
    %227 = vmatprep.subr.mxu0 0.0
    %228 = vmatpush1.msra.mxu0 0.0
    %229 = vmatprep.subr.mxu0 0.0
    %230 = vmatpush1.msra.mxu0 0.0
    %231 = vmatprep.subr.mxu0 0.0
    %232 = vmatpush1.msra.mxu0 0.0
    %233 = vmatprep.subr.mxu0 0.0
    %234 = vmatpush1.msra.mxu0 0.0
    %235 = vmatprep.subr.mxu0 0.0
    %236 = vmatpush1.msra.mxu0 0.0
    %237 = vmatprep.subr.mxu0 0.0
    %238 = vmatpush1.msra.mxu0 0.0
    %239 = vmatprep.subr.mxu0 0.0
    %240 = vmatpush1.msra.mxu0 0.0
    %241 = vmatprep.subr.mxu0 0.0
    %242 = vmatpush1.msra.mxu0 0.0
    %243 = vmatprep.subr.mxu0 0.0
    %244 = vmatpush1.msra.mxu0 0.0
    %245 = vmatprep.subr.mxu0 0.0
    %246 = vmatpush1.msra.mxu0 0.0
    %247 = vmatprep.subr.mxu0 0.0
    %248 = vmatpush1.msra.mxu0 0.0
    %249 = vmatprep.subr.mxu0 0.0
    %250 = vmatpush1.msra.mxu0 0.0
    %251 = vmatprep.subr.mxu0 0.0
    %252 = vmatpush1.msra.mxu0 0.0
    %253 = vmatprep.mubr.f32.mxu0 0.0
    %v254 = vand.u32 %v29, 4294901760
    %v255 = vsub.f32 %v29, %v254
    %256 = vmatmul.mubr.f32.gmra.mrb[0].mxu0 %v255
    %v257 = vpop.f32.mrb[0].mxu0
    %v258 = vadd.f32 %v184, %v257
    %v259 = vpop.f32.mrb[0].mxu0
    %260 = vdwg.mxu0
    %261 = vmatprep.subr.mxu0 0.0
    %v262 = vand.u32 %v33, 4294901760
    %263 = vmatpush1.msra.mxu0 %v262
    %264 = vmatprep.subr.mxu0 0.0
    %265 = vmatpush1.msra.mxu0 0.0
    %266 = vmatprep.subr.mxu0 0.0
    %267 = vmatpush1.msra.mxu0 0.0
    %268 = vmatprep.subr.mxu0 0.0
    %269 = vmatpush1.msra.mxu0 0.0
    %270 = vmatprep.subr.mxu0 0.0
    %271 = vmatpush1.msra.mxu0 0.0
    %272 = vmatprep.subr.mxu0 0.0
    %273 = vmatpush1.msra.mxu0 0.0
    %274 = vmatprep.subr.mxu0 0.0
    %275 = vmatpush1.msra.mxu0 0.0
    %276 = vmatprep.subr.mxu0 0.0
    %277 = vmatpush1.msra.mxu0 0.0
    %278 = vmatprep.subr.mxu0 0.0
    %279 = vmatpush1.msra.mxu0 0.0
    %280 = vmatprep.subr.mxu0 0.0
    %281 = vmatpush1.msra.mxu0 0.0
    %282 = vmatprep.subr.mxu0 0.0
    %283 = vmatpush1.msra.mxu0 0.0
    %284 = vmatprep.subr.mxu0 0.0
    %285 = vmatpush1.msra.mxu0 0.0
    %286 = vmatprep.subr.mxu0 0.0
    %287 = vmatpush1.msra.mxu0 0.0
    %288 = vmatprep.subr.mxu0 0.0
    %289 = vmatpush1.msra.mxu0 0.0
    %290 = vmatprep.subr.mxu0 0.0
    %291 = vmatpush1.msra.mxu0 0.0
    %292 = vmatprep.subr.mxu0 0.0
    %293 = vmatpush1.msra.mxu0 0.0
    %294 = vmatprep.subr.mxu0 0.0
    %295 = vmatpush1.msra.mxu0 0.0
    %296 = vmatprep.subr.mxu0 0.0
    %297 = vmatpush1.msra.mxu0 0.0
    %298 = vmatprep.subr.mxu0 0.0
    %299 = vmatpush1.msra.mxu0 0.0
    %300 = vmatprep.subr.mxu0 0.0
    %301 = vmatpush1.msra.mxu0 0.0
    %302 = vmatprep.subr.mxu0 0.0
    %303 = vmatpush1.msra.mxu0 0.0
    %304 = vmatprep.subr.mxu0 0.0
    %305 = vmatpush1.msra.mxu0 0.0
    %306 = vmatprep.subr.mxu0 0.0
    %307 = vmatpush1.msra.mxu0 0.0
    %308 = vmatprep.subr.mxu0 0.0
    %309 = vmatpush1.msra.mxu0 0.0
    %310 = vmatprep.subr.mxu0 0.0
    %311 = vmatpush1.msra.mxu0 0.0
    %312 = vmatprep.subr.mxu0 0.0
    %313 = vmatpush1.msra.mxu0 0.0
    %314 = vmatprep.subr.mxu0 0.0
    %315 = vmatpush1.msra.mxu0 0.0
    %316 = vmatprep.subr.mxu0 0.0
    %317 = vmatpush1.msra.mxu0 0.0
    %318 = vmatprep.subr.mxu0 0.0
    %319 = vmatpush1.msra.mxu0 0.0
    %320 = vmatprep.subr.mxu0 0.0
    %321 = vmatpush1.msra.mxu0 0.0
    %322 = vmatprep.subr.mxu0 0.0
    %323 = vmatpush1.msra.mxu0 0.0
    %324 = vmatprep.subr.mxu0 0.0
    %325 = vmatpush1.msra.mxu0 0.0
    %326 = vmatprep.mubr.f32.mxu0 0.0
    %v327 = vand.u32 %v29, 4294901760
    %v328 = vsub.f32 %v29, %v327
    %v329 = vand.u32 %v328, 4294901760
    %330 = vmatmul.mubr.f32.gmra.mrb[0].mxu0 %v329
    %v331 = vpop.f32.mrb[0].mxu0
    %v332 = vadd.f32 %v258, %v331
    %v333 = vpop.f32.mrb[0].mxu0
    %334 = vdwg.mxu0
    %335 = vmatprep.subr.mxu0 0.0
    %v336 = vand.u32 %v33, 4294901760
    %v337 = vsub.f32 %v33, %v336
    %v338 = vand.u32 %v337, 4294901760
    %339 = vmatpush1.msra.mxu0 %v338
    %340 = vmatprep.subr.mxu0 0.0
    %341 = vmatpush1.msra.mxu0 0.0
    %342 = vmatprep.subr.mxu0 0.0
    %343 = vmatpush1.msra.mxu0 0.0
    %344 = vmatprep.subr.mxu0 0.0
    %345 = vmatpush1.msra.mxu0 0.0
    %346 = vmatprep.subr.mxu0 0.0
    %347 = vmatpush1.msra.mxu0 0.0
    %348 = vmatprep.subr.mxu0 0.0
    %349 = vmatpush1.msra.mxu0 0.0
    %350 = vmatprep.subr.mxu0 0.0
    %351 = vmatpush1.msra.mxu0 0.0
    %352 = vmatprep.subr.mxu0 0.0
    %353 = vmatpush1.msra.mxu0 0.0
    %354 = vmatprep.subr.mxu0 0.0
    %355 = vmatpush1.msra.mxu0 0.0
    %356 = vmatprep.subr.mxu0 0.0
    %357 = vmatpush1.msra.mxu0 0.0
    %358 = vmatprep.subr.mxu0 0.0
    %359 = vmatpush1.msra.mxu0 0.0
    %360 = vmatprep.subr.mxu0 0.0
    %361 = vmatpush1.msra.mxu0 0.0
    %362 = vmatprep.subr.mxu0 0.0
    %363 = vmatpush1.msra.mxu0 0.0
    %364 = vmatprep.subr.mxu0 0.0
    %365 = vmatpush1.msra.mxu0 0.0
    %366 = vmatprep.subr.mxu0 0.0
    %367 = vmatpush1.msra.mxu0 0.0
    %368 = vmatprep.subr.mxu0 0.0
    %369 = vmatpush1.msra.mxu0 0.0
    %370 = vmatprep.subr.mxu0 0.0
    %371 = vmatpush1.msra.mxu0 0.0
    %372 = vmatprep.subr.mxu0 0.0
    %373 = vmatpush1.msra.mxu0 0.0
    %374 = vmatprep.subr.mxu0 0.0
    %375 = vmatpush1.msra.mxu0 0.0
    %376 = vmatprep.subr.mxu0 0.0
    %377 = vmatpush1.msra.mxu0 0.0
    %378 = vmatprep.subr.mxu0 0.0
    %379 = vmatpush1.msra.mxu0 0.0
    %380 = vmatprep.subr.mxu0 0.0
    %381 = vmatpush1.msra.mxu0 0.0
    %382 = vmatprep.subr.mxu0 0.0
    %383 = vmatpush1.msra.mxu0 0.0
    %384 = vmatprep.subr.mxu0 0.0
    %385 = vmatpush1.msra.mxu0 0.0
    %386 = vmatprep.subr.mxu0 0.0
    %387 = vmatpush1.msra.mxu0 0.0
    %388 = vmatprep.subr.mxu0 0.0
    %389 = vmatpush1.msra.mxu0 0.0
    %390 = vmatprep.subr.mxu0 0.0
    %391 = vmatpush1.msra.mxu0 0.0
    %392 = vmatprep.subr.mxu0 0.0
    %393 = vmatpush1.msra.mxu0 0.0
    %394 = vmatprep.subr.mxu0 0.0
    %395 = vmatpush1.msra.mxu0 0.0
    %396 = vmatprep.subr.mxu0 0.0
    %397 = vmatpush1.msra.mxu0 0.0
    %398 = vmatprep.subr.mxu0 0.0
    %399 = vmatpush1.msra.mxu0 0.0
    %400 = vmatprep.subr.mxu0 0.0
    %401 = vmatpush1.msra.mxu0 0.0
    %402 = vmatprep.mubr.f32.mxu0 0.0
    %v403 = vand.u32 %v29, 4294901760
    %404 = vmatmul.mubr.f32.gmra.mrb[0].mxu0 %v403
    %v405 = vpop.f32.mrb[0].mxu0
    %v406 = vadd.f32 %v332, %v405
    %v407 = vpop.f32.mrb[0].mxu0
    %408 = vdwg.mxu0
    %409 = vmatprep.subr.mxu0 0.0
    %v410 = vand.u32 %v33, 4294901760
    %411 = vmatpush1.msra.mxu0 %v410
    %412 = vmatprep.subr.mxu0 0.0
    %413 = vmatpush1.msra.mxu0 0.0
    %414 = vmatprep.subr.mxu0 0.0
    %415 = vmatpush1.msra.mxu0 0.0
    %416 = vmatprep.subr.mxu0 0.0
    %417 = vmatpush1.msra.mxu0 0.0
    %418 = vmatprep.subr.mxu0 0.0
    %419 = vmatpush1.msra.mxu0 0.0
    %420 = vmatprep.subr.mxu0 0.0
    %421 = vmatpush1.msra.mxu0 0.0
    %422 = vmatprep.subr.mxu0 0.0
    %423 = vmatpush1.msra.mxu0 0.0
    %424 = vmatprep.subr.mxu0 0.0
    %425 = vmatpush1.msra.mxu0 0.0
    %426 = vmatprep.subr.mxu0 0.0
    %427 = vmatpush1.msra.mxu0 0.0
    %428 = vmatprep.subr.mxu0 0.0
    %429 = vmatpush1.msra.mxu0 0.0
    %430 = vmatprep.subr.mxu0 0.0
    %431 = vmatpush1.msra.mxu0 0.0
    %432 = vmatprep.subr.mxu0 0.0
    %433 = vmatpush1.msra.mxu0 0.0
    %434 = vmatprep.subr.mxu0 0.0
    %435 = vmatpush1.msra.mxu0 0.0
    %436 = vmatprep.subr.mxu0 0.0
    %437 = vmatpush1.msra.mxu0 0.0
    %438 = vmatprep.subr.mxu0 0.0
    %439 = vmatpush1.msra.mxu0 0.0
    %440 = vmatprep.subr.mxu0 0.0
    %441 = vmatpush1.msra.mxu0 0.0
    %442 = vmatprep.subr.mxu0 0.0
    %443 = vmatpush1.msra.mxu0 0.0
    %444 = vmatprep.subr.mxu0 0.0
    %445 = vmatpush1.msra.mxu0 0.0
    %446 = vmatprep.subr.mxu0 0.0
    %447 = vmatpush1.msra.mxu0 0.0
    %448 = vmatprep.subr.mxu0 0.0
    %449 = vmatpush1.msra.mxu0 0.0
    %450 = vmatprep.subr.mxu0 0.0
    %451 = vmatpush1.msra.mxu0 0.0
    %452 = vmatprep.subr.mxu0 0.0
    %453 = vmatpush1.msra.mxu0 0.0
    %454 = vmatprep.subr.mxu0 0.0
    %455 = vmatpush1.msra.mxu0 0.0
    %456 = vmatprep.subr.mxu0 0.0
    %457 = vmatpush1.msra.mxu0 0.0
    %458 = vmatprep.subr.mxu0 0.0
    %459 = vmatpush1.msra.mxu0 0.0
    %460 = vmatprep.subr.mxu0 0.0
    %461 = vmatpush1.msra.mxu0 0.0
    %462 = vmatprep.subr.mxu0 0.0
    %463 = vmatpush1.msra.mxu0 0.0
    %464 = vmatprep.subr.mxu0 0.0
    %465 = vmatpush1.msra.mxu0 0.0
    %466 = vmatprep.subr.mxu0 0.0
    %467 = vmatpush1.msra.mxu0 0.0
    %468 = vmatprep.subr.mxu0 0.0
    %469 = vmatpush1.msra.mxu0 0.0
    %470 = vmatprep.subr.mxu0 0.0
    %471 = vmatpush1.msra.mxu0 0.0
    %472 = vmatprep.subr.mxu0 0.0
    %473 = vmatpush1.msra.mxu0 0.0
    %474 = vmatprep.mubr.f32.mxu0 0.0
    %v475 = vand.u32 %v29, 4294901760
    %476 = vmatmul.mubr.f32.gmra.mrb[0].mxu0 %v475
    %v477 = vpop.f32.mrb[0].mxu0
    %v478 = vadd.f32 %v406, %v477
    %v479 = vpop.f32.mrb[0].mxu0
    %480 = vdwg.mxu0
    %v481 = vand.u32 2147483647, %v478
    %vm482 = vcmp.le.f32.partialorder %v481, 0.7853982
    %vm483 = vcmp.lt.s32.totalorder %v478, 0
    %v484 = vand.u32 %v478, 2139095040
    %v485 = vshrl.u32 %v484, 23
    %v486 = vsub.s32 %v485, 127
    %v487 = vand.u32 2147483647, %v478
    %v488 = vand.u32 %v487, 8388607
    %v489 = vor.u32 %v488, 8388608
    %v490 = vsub.s32 0, %v489
    %v491 = vadd.s32 %v486, 1
    %vm492 = vcmp.gt.s32.totalorder %v491, 0
    %v493 = vsel %vm492, %v491, 0
    %v494 = vshrl.u32 %v493, 5
    %v495 = vand.u32 %v493, 31
    %v496 = vsub.s32 32, %v495
    %v497 = vshrl.u32 683565275, %v496
    %v498 = vshll.u32 683565275, %v495
    %v499 = vshrl.u32 2475754826, %v496
    %v500 = vor.u32 %v498, %v499
    %v501 = vshll.u32 2475754826, %v495
    %v502 = vshrl.u32 2131351028, %v496
    %v503 = vor.u32 %v501, %v502
    %v504 = vshll.u32 2131351028, %v495
    %v505 = vshrl.u32 2102212464, %v496
    %v506 = vor.u32 %v504, %v505
    %v507 = vshll.u32 2102212464, %v495
    %v508 = vshrl.u32 920167782, %v496
    %v509 = vor.u32 %v507, %v508
    %v510 = vshll.u32 920167782, %v495
    %v511 = vshrl.u32 1326507024, %v496
    %v512 = vor.u32 %v510, %v511
    %vm513 = vcmp.lt.s32.totalorder %v494, 1
    %vm514 = vcmp.lt.s32.totalorder %v494, 2
    %vm515 = vcmp.lt.s32.totalorder %v494, 3
    %vm516 = vcmp.lt.s32.totalorder %v494, 4
    %v517 = vsel %vm513, %v497, %v500
    %v518 = vsel %vm516, %v506, 2102212464
    %v519 = vsel %vm515, %v503, %v518
    %v520 = vsel %vm514, %v517, %v519
    %v521 = vsel %vm513, %v500, %v503
    %v522 = vsel %vm516, %v509, 920167782
    %v523 = vsel %vm515, %v506, %v522
    %v524 = vsel %vm514, %v521, %v523
    %v525 = vsel %vm513, %v503, %v506
    %v526 = vsel %vm516, %v512, 1326507024
    %v527 = vsel %vm515, %v509, %v526
    %v528 = vsel %vm514, %v525, %v527
    %v529 = vshll.u32 %v489, 8
    %v530 = vmul.u32.u64.compose %v529, %v528
    %v531 = vextract.low.u32 %v530
    %v532 = vextract.high.u32 %v530
    %v533 = vmul.u32.u64.compose %v529, %v524
    %v534 = vextract.low.u32 %v533
    %v535 = vextract.high.u32 %v533
    %v536 = vmul.u32 %v529, %v520
    %v537 = vadd.s32 %v532, %v534
    %vm538 = vc.u32 %v532, %v534
    %v539 = vadd.s32 %v535, 1
    %v540 = vsel %vm538, %v539, %v535
    %v541 = vadd.s32 %v536, %v540
    %v542 = vadd.s32 %v541, 536870912
    %v543 = vshrl.u32 %v542, 30
    %v544 = vshll.u32 %v543, 30
    %v545 = vsub.s32 %v541, %v544
    %vm546 = vcmp.lt.s32.totalorder %v545, 0
    %v547 = vsub.s32 0, %v545
    %v548 = vsel %vm546, %v547, %v545
    %v549 = vclz %v548
    %v550 = vsub.s32 %v549, 2
    %vm551 = vcmp.gt.s32.totalorder 0, %v550
    %v552 = vsel %vm551, 0, %v550
    %v553 = vsub.s32 32, %v552
    %v554 = vshll.u32 %v545, %v552
    %v555 = vshrl.u32 %v537, %v553
    %v556 = vor.u32 %v554, %v555
    %v557 = vsub.s32 4294967266, %v552
    %v558 = vadd.s32 %v557, 127
    %v559 = vshll.u32 %v558, 23
    %v560 = vor.u32 4788187, %v559
    %v561 = vand.u32 2147483647, %v560
    %v563 = vcvt.s32.f32 %v556
    %v564 = vmul.f32 %v563, %v561
    %v565 = vxor.u32 %v564, 2147483648
    %v566 = vsel %vm483, %v565, %v564
    %v567 = vsub.s32 4, %v543
    %v568 = vsel %vm483, %v567, %v543
    %v569 = vsel %vm482, %v478, %v566
    %v570 = vsel %vm482, 0, %v568
    %v571 = vcosq.f32.pop %v569
    %v572 = vsinq.f32.pop %v569
    %vm573 = vweird.f32 %v478
    %v574 = vadd.s32 %v570, 3
    %v575 = vand.u32 %v574, 3
    %vm576 = vcmp.lt.s32.totalorder %v575, 2
    %vm577 = vcmp.eq.s32.totalorder %v575, 0
    %v578 = vxor.u32 %v572, 2147483648
    %v579 = vsel %vm577, %v571, %v578
    %vm580 = vcmp.eq.s32.totalorder %v575, 2
    %v581 = vxor.u32 %v571, 2147483648
    %v582 = vsel %vm580, %v581, %v572
    %v583 = vsel %vm576, %v579, %v582
    %v584 = vsel %vm573, nan, %v583
    %v585 = vld [vmem:[%s3] sm:$0x1]
    %vm586 = vcmp.ne.s32.totalorder %v585, 0
    %v587 = vsel %vm586, 1, 0
    %v588 = vlaneseq
    %v589 = vshrl.u32 %v588, 7
    %v590 = vsub.s32 0, %v589
    %v591 = vrot.slane %v587, %v590
    %vm592 = vcmp.eq.s32.totalorder %v591, 1
    %v593 = vsel %vm592, %v478, %v584
    %594 = vst [vmem:[#allocation2] sm:$0xff] %v593
    // Predicated region
    $region18: #{tpu_custom_call.1} parent=1 // pred_check
      _
    $region19: #{tpu_custom_call.1} parent=1 // pred_check_branch
      %596 = sbr.rel (0) target = $region21
    $region20: #{tpu_custom_call.1} parent=1 // pred_region
      %s598 = ssub.s32 128, 128
      %599 = vsyncadd [#allocation3], %s598
      %s601 = sshll.u32 [#allocation2], 4
      %s602 = int_to_ptr.vmem [resolvable:$true] %s601
      %604 = dma.vmem_to_hbm [thread:$0]  %s602, 128, %s4, [#allocation3]
    $region21: #{tpu_custom_call.1} parent=1 // pred_fallthru
      _
    // Predicated region
    $region22: #{tpu_custom_call.1} parent=1 // pred_check
      _
    $region23: #{tpu_custom_call.1} parent=1 // pred_check_branch
      %606 = sbr.rel (0) target = $region25
    $region24: #{tpu_custom_call.1} parent=1 // pred_region
      %607 = dma.done [#allocation3], 128
    $region25: #{tpu_custom_call.1} parent=1 // pred_fallthru
      _
    %608 = vsyncpa [#allocation3], 1

</llo_original>
